<compile_context>
chip_gen: v6e
topology: v6e:2x2x1
jax: 0.10.0
libtpu: 0.0.40
codegen_flags: <defaults>
</compile_context>

<pallas_src>
import jax
import jax.numpy as jnp
from jax.experimental import pallas as pl
from jax.experimental.pallas import tpu as pltpu

HIDDEN = 256          # per-head hidden width (matches nn.Linear(..., 256))
BATCH_BLOCK = 256     # batch tile size once the batch is large enough

PARAM_ORDER = ("w1s", "w1a", "b14", "w2", "b2", "w5", "b5", "w36", "b36")


def critic_kernel(s_ref, a_ref,
                  w1s_ref, w1a_ref, b14_ref,
                  w2_ref, b2_ref, w5_ref, b5_ref,
                  w36_ref, b36_ref,
                  q_ref):
    """Twin-Q MLP hot path, fully resident in VMEM.

    Layer 1 (both heads fused along N):  h  = s @ W1s + a @ W1a + b14      (B, 512)
    Layer 2 (per head):                  g1 = relu(h[:, :256] @ W2 + b2)   (B, 256)
                                         g2 = relu(h[:, 256:] @ W5 + b5)   (B, 256)
    Layer 3 (block-diagonal fused):      q  = [g1 | g2] @ W36 + b36        (B, 2)
    """
    # bf16 inputs keep the MXU in its native bf16 x bf16 -> f32 mode.
    s = s_ref[...].astype(w1s_ref.dtype)
    a = a_ref[...].astype(w1a_ref.dtype)

    # Fused first layer for both heads; fp32 accumulation on the MXU.
    h = (jnp.dot(s, w1s_ref[...], preferred_element_type=jnp.float32)
         + jnp.dot(a, w1a_ref[...], preferred_element_type=jnp.float32)
         + b14_ref[...])
    h = jnp.maximum(h, 0.0).astype(w2_ref.dtype)          # (B, 512) bf16

    h1 = h[:, :HIDDEN]
    h2 = h[:, HIDDEN:]
    g1 = jnp.maximum(
        jnp.dot(h1, w2_ref[...], preferred_element_type=jnp.float32) + b2_ref[...], 0.0)
    g2 = jnp.maximum(
        jnp.dot(h2, w5_ref[...], preferred_element_type=jnp.float32) + b5_ref[...], 0.0)

    # Fused output layer: single K=512, N=2 matmul against block-diagonal W36,
    # one (B, 2) store instead of two N=1 matmuls + two masked stores.
    g = jnp.concatenate([g1, g2], axis=1).astype(w36_ref.dtype)   # (B, 512)
    q_ref[...] = (jnp.dot(g, w36_ref[...], preferred_element_type=jnp.float32)
                  + b36_ref[...]).astype(q_ref.dtype)


def critic_forward(state, action, fused):
    """Forward pass: returns (q1, q2), each (B, 1) float32."""
    B, state_dim = state.shape
    action_dim = action.shape[1]

    # Batch tiling: single grid point at small B; tile (and shard across the two
    # v7x TensorCores) once the batch is a multiple of BATCH_BLOCK.
    if B >= BATCH_BLOCK and B % BATCH_BLOCK == 0:
        block_b = BATCH_BLOCK
    else:
        block_b = B
    grid = (B // block_b,)

    flat = [fused[k] for k in PARAM_ORDER]

    in_specs = (
        [pl.BlockSpec((block_b, state_dim), lambda i: (i, 0)),
         pl.BlockSpec((block_b, action_dim), lambda i: (i, 0))]
        # Weights/biases: full-array blocks, constant index_map -> stay resident.
        + [pl.BlockSpec(p.shape, lambda i: (0, 0)) for p in flat]
    )
    out_spec = pl.BlockSpec((block_b, 2), lambda i: (i, 0))

    q = pl.pallas_call(
        critic_kernel,
        out_shape=jax.ShapeDtypeStruct((B, 2), jnp.float32),
        grid=grid,
        in_specs=in_specs,
        out_specs=out_spec,
        compiler_params=pltpu.CompilerParams(
            dimension_semantics=("parallel",)),
    )(state, action, *flat)

    return q[:, 0:1], q[:, 1:2]


def init_linear(key, in_features, out_features):
    """torch.nn.Linear default init: U(-1/sqrt(fan_in), 1/sqrt(fan_in)).
    Weight returned transposed as (in, out); bias as (1, out)."""
    kw, kb = jax.random.split(key)
    bound = 1.0 / jnp.sqrt(in_features)
    w = jax.random.uniform(kw, (in_features, out_features), jnp.float32, -bound, bound)
    b = jax.random.uniform(kb, (1, out_features), jnp.float32, -bound, bound)
    return w, b


def make_params(key, state_dim, action_dim):
    """Torch-layout master params (fp32, weights pre-transposed to (in, out))."""
    d = state_dim + action_dim
    keys = jax.random.split(key, 6)
    p = {}
    p["w1"], p["b1"] = init_linear(keys[0], d, HIDDEN)
    p["w2"], p["b2"] = init_linear(keys[1], HIDDEN, HIDDEN)
    p["w3"], p["b3"] = init_linear(keys[2], HIDDEN, 1)
    p["w4"], p["b4"] = init_linear(keys[3], d, HIDDEN)
    p["w5"], p["b5"] = init_linear(keys[4], HIDDEN, HIDDEN)
    p["w6"], p["b6"] = init_linear(keys[5], HIDDEN, 1)
    return p


def fuse_params(params, state_dim, weight_dtype=jnp.bfloat16):
    """One-time repack of torch-layout params into the fused bf16 kernel layout.
    w1/w4 are stacked along N (state rows first, then action rows, matching the
    original cat([state, action]) order); w3/w6 become a block-diagonal (512, 2)."""
    w14 = jnp.concatenate([params["w1"], params["w4"]], axis=1)        # (D, 512)
    return {
        "w1s": w14[:state_dim].astype(weight_dtype),                   # (state_dim, 512)
        "w1a": w14[state_dim:].astype(weight_dtype),                   # (action_dim, 512)
        "b14": jnp.concatenate([params["b1"], params["b4"]], axis=1),  # (1, 512) f32
        "w2": params["w2"].astype(weight_dtype),                       # (256, 256)
        "b2": params["b2"],                                            # (1, 256) f32
        "w5": params["w5"].astype(weight_dtype),                       # (256, 256)
        "b5": params["b5"],                                            # (1, 256) f32
        "w36": jnp.block(
            [[params["w3"], jnp.zeros_like(params["w3"])],
             [jnp.zeros_like(params["w6"]), params["w6"]]]).astype(weight_dtype),  # (512, 2)
        "b36": jnp.concatenate([params["b3"], params["b6"]], axis=1),  # (1, 2) f32
    }


def critic_reference_fused(state, action, fused):
    """Pure-JAX mirror of the kernel math (same bf16 casts, fp32 accumulation)."""
    s = state.astype(fused["w1s"].dtype)
    a = action.astype(fused["w1a"].dtype)
    h = (jnp.dot(s, fused["w1s"], preferred_element_type=jnp.float32)
         + jnp.dot(a, fused["w1a"], preferred_element_type=jnp.float32)
         + fused["b14"])
    h = jnp.maximum(h, 0.0).astype(fused["w2"].dtype)
    g1 = jnp.maximum(jnp.dot(h[:, :HIDDEN], fused["w2"],
                             preferred_element_type=jnp.float32) + fused["b2"], 0.0)
    g2 = jnp.maximum(jnp.dot(h[:, HIDDEN:], fused["w5"],
                             preferred_element_type=jnp.float32) + fused["b5"], 0.0)
    g = jnp.concatenate([g1, g2], axis=1).astype(fused["w36"].dtype)
    q = jnp.dot(g, fused["w36"], preferred_element_type=jnp.float32) + fused["b36"]
    return q[:, 0:1], q[:, 1:2]


def critic_reference_fp32(state, action, params):
    """Exact fp32 semantics of the original PyTorch module."""
    sa = jnp.concatenate([state, action], axis=1)
    h1 = jnp.maximum(sa @ params["w1"] + params["b1"], 0.0)
    h1 = jnp.maximum(h1 @ params["w2"] + params["b2"], 0.0)
    q1 = h1 @ params["w3"] + params["b3"]
    h2 = jnp.maximum(sa @ params["w4"] + params["b4"], 0.0)
    h2 = jnp.maximum(h2 @ params["w5"] + params["b5"], 0.0)
    q2 = h2 @ params["w6"] + params["b6"]
    return q1, q2


if __name__ == "__main__":
    key = jax.random.PRNGKey(0)
    k_params, k_state, k_action = jax.random.split(key, 3)

    batch = 8
    state_dim = 16
    action_dim = 4

    params = make_params(k_params, state_dim, action_dim)
    fused = fuse_params(params, state_dim)   # one-time repack (bf16, fused layouts)

    state = jax.random.normal(k_state, (batch, state_dim), jnp.float32)
    action = jax.random.normal(k_action, (batch, action_dim), jnp.float32)

    critic_fwd = jax.jit(critic_forward)
    q1, q2 = critic_fwd(state, action, fused)
    jax.block_until_ready((q1, q2))

    assert q1.shape == (batch, 1) and q2.shape == (batch, 1)

    # Tight check against a pure-JAX mirror of the kernel math (same bf16 casts).
    q1_m, q2_m = critic_reference_fused(state, action, fused)
    assert jnp.allclose(q1, q1_m, atol=1e-2, rtol=1e-2)
    assert jnp.allclose(q2, q2_m, atol=1e-2, rtol=1e-2)

    # Loose check against the exact fp32 PyTorch-equivalent semantics
    # (bf16 weights -> relaxed tolerance, per review).
    q1_f, q2_f = critic_reference_fp32(state, action, params)
    assert jnp.allclose(q1, q1_f, atol=5e-2, rtol=5e-2)
    assert jnp.allclose(q2, q2_f, atol=5e-2, rtol=5e-2)

    print("KERNEL_OK")
</pallas_src>

<mosaic_0001>
module attributes {stable_mosaic.version = 11 : i64} {
  func.func @critic_kernel(%arg0: i32, %arg1: memref<8x16xf32, #tpu.memory_space<vmem>>, %arg2: memref<8x4xf32, #tpu.memory_space<vmem>>, %arg3: memref<16x512xbf16, #tpu.memory_space<vmem>>, %arg4: memref<4x512xbf16, #tpu.memory_space<vmem>>, %arg5: memref<1x512xf32, #tpu.memory_space<vmem>>, %arg6: memref<256x256xbf16, #tpu.memory_space<vmem>>, %arg7: memref<1x256xf32, #tpu.memory_space<vmem>>, %arg8: memref<256x256xbf16, #tpu.memory_space<vmem>>, %arg9: memref<1x256xf32, #tpu.memory_space<vmem>>, %arg10: memref<512x2xbf16, #tpu.memory_space<vmem>>, %arg11: memref<1x2xf32, #tpu.memory_space<vmem>>, %arg12: memref<8x2xf32, #tpu.memory_space<vmem>>) attributes {dimension_semantics = [#tpu.dimension_semantics<parallel>], iteration_bounds = array<i64: 1>, scalar_prefetch = 0 : i64, scratch_operands = 0 : i64, tpu.core_type = #tpu.core_type<tc>, window_params = [{transform_indices = @transform_0, window_bounds = array<i64: 8, 16>}, {transform_indices = @transform_1, window_bounds = array<i64: 8, 4>}, {pipeline_mode = #tpu.pipeline_mode<synchronous>, transform_indices = @transform_2, window_bounds = array<i64: 16, 512>}, {pipeline_mode = #tpu.pipeline_mode<synchronous>, transform_indices = @transform_3, window_bounds = array<i64: 4, 512>}, {pipeline_mode = #tpu.pipeline_mode<synchronous>, transform_indices = @transform_4, window_bounds = array<i64: 1, 512>}, {pipeline_mode = #tpu.pipeline_mode<synchronous>, transform_indices = @transform_5, window_bounds = array<i64: 256, 256>}, {pipeline_mode = #tpu.pipeline_mode<synchronous>, transform_indices = @transform_6, window_bounds = array<i64: 1, 256>}, {pipeline_mode = #tpu.pipeline_mode<synchronous>, transform_indices = @transform_7, window_bounds = array<i64: 256, 256>}, {pipeline_mode = #tpu.pipeline_mode<synchronous>, transform_indices = @transform_8, window_bounds = array<i64: 1, 256>}, {pipeline_mode = #tpu.pipeline_mode<synchronous>, transform_indices = @transform_9, window_bounds = array<i64: 512, 2>}, {pipeline_mode = #tpu.pipeline_mode<synchronous>, transform_indices = @transform_10, window_bounds = array<i64: 1, 2>}, {transform_indices = @transform_11, window_bounds = array<i64: 8, 2>}]} {
    %c0 = arith.constant 0 : index
    %c0_0 = arith.constant 0 : index
    %0 = vector.load %arg1[%c0, %c0_0] : memref<8x16xf32, #tpu.memory_space<vmem>>, vector<8x16xf32>
    %1 = arith.truncf %0 : vector<8x16xf32> to vector<8x16xbf16>
    %c0_1 = arith.constant 0 : index
    %c0_2 = arith.constant 0 : index
    %2 = vector.load %arg2[%c0_1, %c0_2] : memref<8x4xf32, #tpu.memory_space<vmem>>, vector<8x4xf32>
    %3 = arith.truncf %2 : vector<8x4xf32> to vector<8x4xbf16>
    %c0_3 = arith.constant 0 : index
    %c0_4 = arith.constant 0 : index
    %4 = vector.load %arg3[%c0_3, %c0_4] : memref<16x512xbf16, #tpu.memory_space<vmem>>, vector<16x512xbf16>
    %cst = arith.constant dense<0.000000e+00> : vector<8x512xf32>
    %5 = tpu.matmul %1, %4, %cst {dimension_numbers = #tpu.dot_dimension_numbers<[1], [0], [0], [1], [0, 0, 1, 1], [], []>} : vector<8x16xbf16>, vector<16x512xbf16>, vector<8x512xf32> -> vector<8x512xf32>
    %c0_5 = arith.constant 0 : index
    %c0_6 = arith.constant 0 : index
    %6 = vector.load %arg4[%c0_5, %c0_6] : memref<4x512xbf16, #tpu.memory_space<vmem>>, vector<4x512xbf16>
    %cst_7 = arith.constant dense<0.000000e+00> : vector<8x512xf32>
    %7 = tpu.matmul %3, %6, %cst_7 {dimension_numbers = #tpu.dot_dimension_numbers<[1], [0], [0], [1], [0, 0, 1, 1], [], []>} : vector<8x4xbf16>, vector<4x512xbf16>, vector<8x512xf32> -> vector<8x512xf32>
    %8 = arith.addf %5, %7 : vector<8x512xf32>
    %c0_8 = arith.constant 0 : index
    %c0_9 = arith.constant 0 : index
    %9 = vector.load %arg5[%c0_8, %c0_9] : memref<1x512xf32, #tpu.memory_space<vmem>>, vector<1x512xf32>
    %10 = vector.broadcast %9 : vector<1x512xf32> to vector<8x512xf32>
    %11 = arith.addf %8, %10 : vector<8x512xf32>
    %cst_10 = arith.constant 0.000000e+00 : f32
    %12 = vector.broadcast %cst_10 : f32 to vector<8x512xf32>
    %13 = arith.maximumf %11, %12 : vector<8x512xf32>
    %14 = arith.truncf %13 : vector<8x512xf32> to vector<8x512xbf16>
    %15 = vector.extract_strided_slice %14 {offsets = [0, 0], sizes = [8, 256], strides = [1, 1]} : vector<8x512xbf16> to vector<8x256xbf16>
    %16 = vector.extract_strided_slice %14 {offsets = [0, 256], sizes = [8, 256], strides = [1, 1]} : vector<8x512xbf16> to vector<8x256xbf16>
    %c0_11 = arith.constant 0 : index
    %c0_12 = arith.constant 0 : index
    %17 = vector.load %arg6[%c0_11, %c0_12] : memref<256x256xbf16, #tpu.memory_space<vmem>>, vector<256x256xbf16>
    %cst_13 = arith.constant dense<0.000000e+00> : vector<8x256xf32>
    %18 = tpu.matmul %15, %17, %cst_13 {dimension_numbers = #tpu.dot_dimension_numbers<[1], [0], [0], [1], [0, 0, 1, 1], [], []>} : vector<8x256xbf16>, vector<256x256xbf16>, vector<8x256xf32> -> vector<8x256xf32>
    %c0_14 = arith.constant 0 : index
    %c0_15 = arith.constant 0 : index
    %19 = vector.load %arg7[%c0_14, %c0_15] : memref<1x256xf32, #tpu.memory_space<vmem>>, vector<1x256xf32>
    %20 = vector.broadcast %19 : vector<1x256xf32> to vector<8x256xf32>
    %21 = arith.addf %18, %20 : vector<8x256xf32>
    %cst_16 = arith.constant 0.000000e+00 : f32
    %22 = vector.broadcast %cst_16 : f32 to vector<8x256xf32>
    %23 = arith.maximumf %21, %22 : vector<8x256xf32>
    %c0_17 = arith.constant 0 : index
    %c0_18 = arith.constant 0 : index
    %24 = vector.load %arg8[%c0_17, %c0_18] : memref<256x256xbf16, #tpu.memory_space<vmem>>, vector<256x256xbf16>
    %cst_19 = arith.constant dense<0.000000e+00> : vector<8x256xf32>
    %25 = tpu.matmul %16, %24, %cst_19 {dimension_numbers = #tpu.dot_dimension_numbers<[1], [0], [0], [1], [0, 0, 1, 1], [], []>} : vector<8x256xbf16>, vector<256x256xbf16>, vector<8x256xf32> -> vector<8x256xf32>
    %c0_20 = arith.constant 0 : index
    %c0_21 = arith.constant 0 : index
    %26 = vector.load %arg9[%c0_20, %c0_21] : memref<1x256xf32, #tpu.memory_space<vmem>>, vector<1x256xf32>
    %27 = vector.broadcast %26 : vector<1x256xf32> to vector<8x256xf32>
    %28 = arith.addf %25, %27 : vector<8x256xf32>
    %cst_22 = arith.constant 0.000000e+00 : f32
    %29 = vector.broadcast %cst_22 : f32 to vector<8x256xf32>
    %30 = arith.maximumf %28, %29 : vector<8x256xf32>
    %31 = tpu.concatenate %23, %30 in 1 : vector<8x256xf32>, vector<8x256xf32> -> vector<8x512xf32>
    %32 = arith.truncf %31 : vector<8x512xf32> to vector<8x512xbf16>
    %c0_23 = arith.constant 0 : index
    %c0_24 = arith.constant 0 : index
    %33 = vector.load %arg10[%c0_23, %c0_24] : memref<512x2xbf16, #tpu.memory_space<vmem>>, vector<512x2xbf16>
    %cst_25 = arith.constant dense<0.000000e+00> : vector<8x2xf32>
    %34 = tpu.matmul %32, %33, %cst_25 {dimension_numbers = #tpu.dot_dimension_numbers<[1], [0], [0], [1], [0, 0, 1, 1], [], []>} : vector<8x512xbf16>, vector<512x2xbf16>, vector<8x2xf32> -> vector<8x2xf32>
    %c0_26 = arith.constant 0 : index
    %c0_27 = arith.constant 0 : index
    %35 = vector.load %arg11[%c0_26, %c0_27] : memref<1x2xf32, #tpu.memory_space<vmem>>, vector<1x2xf32>
    %36 = vector.broadcast %35 : vector<1x2xf32> to vector<8x2xf32>
    %37 = arith.addf %34, %36 : vector<8x2xf32>
    %c0_28 = arith.constant 0 : index
    %c0_29 = arith.constant 0 : index
    %38 = vector.load %arg12[%c0_28, %c0_29] : memref<8x2xf32, #tpu.memory_space<vmem>>, vector<8x2xf32>
    tpu.vector_store %arg12[%c0_28, %c0_29], %37 {strides = array<i32>} : memref<8x2xf32, #tpu.memory_space<vmem>>, vector<8x2xf32>,
    return
  }
  func.func @transform_0(%arg0: i32) -> (i32, i32) {
    %c0_i32 = arith.constant 0 : i32
    %c0_i32_0 = arith.constant 0 : i32
    return %arg0, %c0_i32 : i32, i32
  }
  func.func @transform_1(%arg0: i32) -> (i32, i32) {
    %c0_i32 = arith.constant 0 : i32
    %c0_i32_0 = arith.constant 0 : i32
    return %arg0, %c0_i32 : i32, i32
  }
  func.func @transform_2(%arg0: i32) -> (i32, i32) {
    %c0_i32 = arith.constant 0 : i32
    %c0_i32_0 = arith.constant 0 : i32
    %c0_i32_1 = arith.constant 0 : i32
    return %c0_i32, %c0_i32_0 : i32, i32
  }
  func.func @transform_3(%arg0: i32) -> (i32, i32) {
    %c0_i32 = arith.constant 0 : i32
    %c0_i32_0 = arith.constant 0 : i32
    %c0_i32_1 = arith.constant 0 : i32
    return %c0_i32, %c0_i32_0 : i32, i32
  }
  func.func @transform_4(%arg0: i32) -> (i32, i32) {
    %c0_i32 = arith.constant 0 : i32
    %c0_i32_0 = arith.constant 0 : i32
    %c0_i32_1 = arith.constant 0 : i32
    return %c0_i32, %c0_i32_0 : i32, i32
  }
  func.func @transform_5(%arg0: i32) -> (i32, i32) {
    %c0_i32 = arith.constant 0 : i32
    %c0_i32_0 = arith.constant 0 : i32
    %c0_i32_1 = arith.constant 0 : i32
    return %c0_i32, %c0_i32_0 : i32, i32
  }
  func.func @transform_6(%arg0: i32) -> (i32, i32) {
    %c0_i32 = arith.constant 0 : i32
    %c0_i32_0 = arith.constant 0 : i32
    %c0_i32_1 = arith.constant 0 : i32
    return %c0_i32, %c0_i32_0 : i32, i32
  }
  func.func @transform_7(%arg0: i32) -> (i32, i32) {
    %c0_i32 = arith.constant 0 : i32
    %c0_i32_0 = arith.constant 0 : i32
    %c0_i32_1 = arith.constant 0 : i32
    return %c0_i32, %c0_i32_0 : i32, i32
  }
  func.func @transform_8(%arg0: i32) -> (i32, i32) {
    %c0_i32 = arith.constant 0 : i32
    %c0_i32_0 = arith.constant 0 : i32
    %c0_i32_1 = arith.constant 0 : i32
    return %c0_i32, %c0_i32_0 : i32, i32
  }
  func.func @transform_9(%arg0: i32) -> (i32, i32) {
    %c0_i32 = arith.constant 0 : i32
    %c0_i32_0 = arith.constant 0 : i32
    %c0_i32_1 = arith.constant 0 : i32
    return %c0_i32, %c0_i32_0 : i32, i32
  }
  func.func @transform_10(%arg0: i32) -> (i32, i32) {
    %c0_i32 = arith.constant 0 : i32
    %c0_i32_0 = arith.constant 0 : i32
    %c0_i32_1 = arith.constant 0 : i32
    return %c0_i32, %c0_i32_0 : i32, i32
  }
  func.func @transform_11(%arg0: i32) -> (i32, i32) {
    %c0_i32 = arith.constant 0 : i32
    %c0_i32_0 = arith.constant 0 : i32
    return %arg0, %c0_i32 : i32, i32
  }
}

</mosaic_0001>

<llo_original>
// kernel: critic_forward.1
$region0: #{critic_forward.1}
  #allocation0 [shape = 'u32[]', space=smem, size = 0x4, offset = 0x4, fixed_abs, tag = 'smem constant byte address 0x4 - core index']
  #allocation1 [shape = 'u32[144,128]{1,0:T(1,128)}', space=vmem, size = 0x12000, scoped, tag = 'internal scratch']
  %s0 = inlined_call_operand.vmem [shape: f32[8,16], index: 0, kind: input, shape index: {}]
  %s1 = inlined_call_operand.vmem [shape: f32[8,4], index: 1, kind: input, shape index: {}]
  %s2 = inlined_call_operand.hbm [shape: bf16[16,512], index: 2, kind: input, shape index: {}]
  %s3 = inlined_call_operand.vmem [shape: bf16[4,512], index: 3, kind: input, shape index: {}]
  %s4 = inlined_call_operand.vmem [shape: f32[1,512], index: 4, kind: input, shape index: {}]
  %s5 = inlined_call_operand.vmem [shape: bf16[256,256], index: 5, kind: input, shape index: {}]
  %s6 = inlined_call_operand.vmem [shape: f32[1,256], index: 6, kind: input, shape index: {}]
  %s7 = inlined_call_operand.hbm [shape: bf16[256,256], index: 7, kind: input, shape index: {}]
  %s8 = inlined_call_operand.vmem [shape: f32[1,256], index: 8, kind: input, shape index: {}]
  %s9 = inlined_call_operand.vmem [shape: bf16[512,2], index: 9, kind: input, shape index: {}]
  %s10 = inlined_call_operand.vmem [shape: f32[1,2], index: 10, kind: input, shape index: {}]
  %s11 = inlined_call_operand.vmem [shape: f32[8,2], index: 11, kind: output, shape index: {}]
  %s12 = sld [smem:[#allocation0]]
  $region62: #{critic_forward.1} parent=0
    _
  %s14 = ssub.s32 1, %s12
  %s15 = scalar_select 0, %s14, %s12
  $region1: #{critic_forward.1} parent=0
    #allocation2 [shape = 'u8[16384]{0}', space=vmem, size = 0x4000, scoped, tag = 'input window, operand 2, single buffered']
    #allocation3 [shape = 's32[1]{0}', space=sflag, size = 0x4, scoped, tag = 'scoped memory for critic_forward.1']
    #allocation4 [shape = 'u8[131072]{0}', space=vmem, size = 0x20000, scoped, tag = 'input window, operand 7, single buffered']
    #allocation5 [shape = 's32[1]{0}', space=sflag, size = 0x4, scoped, tag = 'scoped memory for critic_forward.1']
    %16 = vsyncpa [#allocation3], 0
    %17 = vsyncpa [#allocation5], 0
    // Predicated region
    $region2: #{critic_forward.1} parent=1 // pred_check
      _
    $region3: #{critic_forward.1} parent=1 // pred_check_branch
      %19 = sbr.rel (0) target = $region5
    $region4: #{critic_forward.1} parent=1 // pred_region
      _
    $region5: #{critic_forward.1} parent=1 // pred_fallthru
      _
    // Predicated region
    $region6: #{critic_forward.1} parent=1 // pred_check
      _
    $region7: #{critic_forward.1} parent=1 // pred_check_branch
      %21 = sbr.rel (0) target = $region9
    $region8: #{critic_forward.1} parent=1 // pred_region
      _
    $region9: #{critic_forward.1} parent=1 // pred_fallthru
      _
    // Predicated region
    $region10: #{critic_forward.1} parent=1 // pred_check
      _
    $region11: #{critic_forward.1} parent=1 // pred_check_branch
      %23 = sbr.rel (0) target = $region13
    $region12: #{critic_forward.1} parent=1 // pred_region
      %s25 = ssub.s32 512, 512
      %26 = vsyncadd [#allocation3], %s25
      %s27 = sshll.u32 [#allocation2], 4
      %s28 = int_to_ptr.vmem [resolvable:$true] %s27
      %33 = dma.hbm_to_vmem [thread:$0]  %s2, 512, %s28, [#allocation3], 256, 256, 16
    $region13: #{critic_forward.1} parent=1 // pred_fallthru
      _
    // Predicated region
    $region14: #{critic_forward.1} parent=1 // pred_check
      _
    $region15: #{critic_forward.1} parent=1 // pred_check_branch
      %35 = sbr.rel (0) target = $region17
    $region16: #{critic_forward.1} parent=1 // pred_region
      _
    $region17: #{critic_forward.1} parent=1 // pred_fallthru
      _
    // Predicated region
    $region18: #{critic_forward.1} parent=1 // pred_check
      _
    $region19: #{critic_forward.1} parent=1 // pred_check_branch
      %37 = sbr.rel (0) target = $region21
    $region20: #{critic_forward.1} parent=1 // pred_region
      _
    $region21: #{critic_forward.1} parent=1 // pred_fallthru
      _
    // Predicated region
    $region22: #{critic_forward.1} parent=1 // pred_check
      _
    $region23: #{critic_forward.1} parent=1 // pred_check_branch
      %39 = sbr.rel (0) target = $region25
    $region24: #{critic_forward.1} parent=1 // pred_region
      _
    $region25: #{critic_forward.1} parent=1 // pred_fallthru
      _
    // Predicated region
    $region26: #{critic_forward.1} parent=1 // pred_check
      _
    $region27: #{critic_forward.1} parent=1 // pred_check_branch
      %41 = sbr.rel (0) target = $region29
    $region28: #{critic_forward.1} parent=1 // pred_region
      _
    $region29: #{critic_forward.1} parent=1 // pred_fallthru
      _
    // Predicated region
    $region30: #{critic_forward.1} parent=1 // pred_check
      _
    $region31: #{critic_forward.1} parent=1 // pred_check_branch
      %43 = sbr.rel (0) target = $region33
    $region32: #{critic_forward.1} parent=1 // pred_region
      %s45 = ssub.s32 4096, 4096
      %46 = vsyncadd [#allocation5], %s45
      %s47 = sshll.u32 [#allocation4], 4
      %s48 = int_to_ptr.vmem [resolvable:$true] %s47
      %53 = dma.hbm_to_vmem [thread:$0]  %s7, 4096, %s48, [#allocation5], 128, 128, 8
    $region33: #{critic_forward.1} parent=1 // pred_fallthru
      _
    // Predicated region
    $region34: #{critic_forward.1} parent=1 // pred_check
      _
    $region35: #{critic_forward.1} parent=1 // pred_check_branch
      %55 = sbr.rel (0) target = $region37
    $region36: #{critic_forward.1} parent=1 // pred_region
      _
    $region37: #{critic_forward.1} parent=1 // pred_fallthru
      _
    // Predicated region
    $region38: #{critic_forward.1} parent=1 // pred_check
      _
    $region39: #{critic_forward.1} parent=1 // pred_check_branch
      %57 = sbr.rel (0) target = $region41
    $region40: #{critic_forward.1} parent=1 // pred_region
      _
    $region41: #{critic_forward.1} parent=1 // pred_fallthru
      _
    // Predicated region
    $region42: #{critic_forward.1} parent=1 // pred_check
      _
    $region43: #{critic_forward.1} parent=1 // pred_check_branch
      %59 = sbr.rel (0) target = $region45
    $region44: #{critic_forward.1} parent=1 // pred_region
      _
    $region45: #{critic_forward.1} parent=1 // pred_fallthru
      _
    // Predicated region
    $region46: #{critic_forward.1} parent=1 // pred_check
      _
    $region47: #{critic_forward.1} parent=1 // pred_check_branch
      %61 = sbr.rel (0) target = $region49
    $region48: #{critic_forward.1} parent=1 // pred_region
      %62 = dma.done [#allocation3], 512
    $region49: #{critic_forward.1} parent=1 // pred_fallthru
      _
    // Predicated region
    $region50: #{critic_forward.1} parent=1 // pred_check
      _
    $region51: #{critic_forward.1} parent=1 // pred_check_branch
      %64 = sbr.rel (0) target = $region53
    $region52: #{critic_forward.1} parent=1 // pred_region
      %65 = dma.done [#allocation5], 4096
    $region53: #{critic_forward.1} parent=1 // pred_fallthru
      _
    %v67 = vld [vmem:[%s0] sm:$0xff]
    %v68 = vpack.c.bf16 %v67, %v67
    %v69 = vld [vmem:[%s1] sm:$0xff]
    %v70 = vpack.c.bf16 %v69, %v69
    %v71 = vld [vmem:[#allocation2] sm:$0xff]
    %v72 = vld [vmem:[#allocation2 + $0x8] sm:$0xff]
    %v73 = vld [vmem:[#allocation2 + $0x10] sm:$0xff]
    %v74 = vld [vmem:[#allocation2 + $0x18] sm:$0xff]
    %v75 = vld [vmem:[%s3] sm:$0xff]
    %v77 = vcombine.high %v75, %v75
    %v79 = vunpack.c.l.s4 1983009808
    %v80 = vunpack.c.0.s8 %v79
    %v81 = vlaneseq
    %v82 = vshrl.u32 %v81, 7
    %v83 = vsub.s32 %v80, %v82
    %v84 = vrot.slane %v75, %v83
    %v86 = vunpack.c.l.s4 1983009808
    %v87 = vunpack.c.0.s8 %v86
    %v88 = vlaneseq
    %v89 = vshrl.u32 %v88, 7
    %v90 = vsub.s32 %v87, %v89
    %v91 = vrot.slane %v77, %v90
    %v92 = vcombine.high %v84, %v84
    %v93 = vcombine.high %v91, %v91
    %vm94 = vcmask 31744
    %v96 = vsel %vm94, %v70, 0
    %vm98 = vcmask 1041408
    %v100 = vsel %vm98, %v84, 0
    %v103 = vsel %vm98, %v92, 0
    %v106 = vsel %vm98, %v91, 0
    %v109 = vsel %vm98, %v93, 0
    %111 = vmatprep.subr.bf16.mxu0 0
    %112 = vmatpush1.bf16.msra.mxu0 0
    %113 = vmatprep.subr.bf16.mxu0 0
    %114 = vmatpush1.bf16.msra.mxu0 0
    %115 = vmatprep.subr.bf16.mxu0 0
    %116 = vmatpush1.bf16.msra.mxu0 0
    %117 = vmatprep.subr.bf16.mxu0 0
    %118 = vmatpush1.bf16.msra.mxu0 0
    %119 = vmatprep.subr.bf16.mxu0 0
    %120 = vmatpush1.bf16.msra.mxu0 0
    %121 = vmatprep.subr.bf16.mxu0 0
    %122 = vmatpush1.bf16.msra.mxu0 0
    %123 = vmatprep.subr.bf16.mxu0 0
    %124 = vmatpush1.bf16.msra.mxu0 0
    %125 = vmatprep.subr.bf16.mxu0 %v103
    %126 = vmatpush1.bf16.msra.mxu0 %v100
    %127 = vmatprep.subr.bf16.mxu0 0
    %128 = vmatpush2.bf16.msra.mxu0 0
    %129 = vmatprep.subr.bf16.mxu0 0
    %130 = vmatpush2.bf16.msra.mxu0 0
    %131 = vmatprep.subr.bf16.mxu0 0
    %132 = vmatpush2.bf16.msra.mxu0 0
    %133 = vmatprep.subr.bf16.mxu0 0
    %134 = vmatpush2.bf16.msra.mxu0 0
    %135 = vmatprep.subr.bf16.mxu0 0
    %136 = vmatpush2.bf16.msra.mxu0 0
    %137 = vmatprep.subr.bf16.mxu0 0
    %138 = vmatpush2.bf16.msra.mxu0 0
    %139 = vmatprep.subr.bf16.mxu0 0
    %140 = vmatpush2.bf16.msra.mxu0 0
    %141 = vmatprep.subr.bf16.mxu0 0
    %142 = vmatpush2.bf16.msra.mxu0 0
    %143 = vmatprep.mubr.bf16.mxu0 0
    %144 = vmatmul.mubr.bf16.gmra.mxu0 %v96
    %v145 = vpop.f32.mrf.mxu0
    %v146 = vadd.f32 0.0, %v145
    %v147 = vpop.f32.mrf.mxu0
    %v148 = vadd.f32 0.0, %v147
    %v149 = vpop.f32.mrf.mxu0
    %v150 = vpop.f32.mrf.mxu0
    %151 = vdwg.mxu0
    %152 = vmatprep.subr.bf16.mxu0 0
    %153 = vmatpush1.bf16.msra.mxu0 0
    %154 = vmatprep.subr.bf16.mxu0 0
    %155 = vmatpush1.bf16.msra.mxu0 0
    %156 = vmatprep.subr.bf16.mxu0 0
    %157 = vmatpush1.bf16.msra.mxu0 0
    %158 = vmatprep.subr.bf16.mxu0 0
    %159 = vmatpush1.bf16.msra.mxu0 0
    %160 = vmatprep.subr.bf16.mxu0 0
    %161 = vmatpush1.bf16.msra.mxu0 0
    %162 = vmatprep.subr.bf16.mxu0 0
    %163 = vmatpush1.bf16.msra.mxu0 0
    %164 = vmatprep.subr.bf16.mxu0 0
    %165 = vmatpush1.bf16.msra.mxu0 0
    %166 = vmatprep.subr.bf16.mxu0 %v109
    %167 = vmatpush1.bf16.msra.mxu0 %v106
    %168 = vmatprep.subr.bf16.mxu0 0
    %169 = vmatpush2.bf16.msra.mxu0 0
    %170 = vmatprep.subr.bf16.mxu0 0
    %171 = vmatpush2.bf16.msra.mxu0 0
    %172 = vmatprep.subr.bf16.mxu0 0
    %173 = vmatpush2.bf16.msra.mxu0 0
    %174 = vmatprep.subr.bf16.mxu0 0
    %175 = vmatpush2.bf16.msra.mxu0 0
    %176 = vmatprep.subr.bf16.mxu0 0
    %177 = vmatpush2.bf16.msra.mxu0 0
    %178 = vmatprep.subr.bf16.mxu0 0
    %179 = vmatpush2.bf16.msra.mxu0 0
    %180 = vmatprep.subr.bf16.mxu0 0
    %181 = vmatpush2.bf16.msra.mxu0 0
    %182 = vmatprep.subr.bf16.mxu0 0
    %183 = vmatpush2.bf16.msra.mxu0 0
    %184 = vmatprep.mubr.bf16.mxu0 0
    %185 = vmatmul.mubr.bf16.gmra.mxu0 %v96
    %v186 = vpop.f32.mrf.mxu0
    %v187 = vadd.f32 0.0, %v186
    %v188 = vpop.f32.mrf.mxu0
    %v189 = vadd.f32 0.0, %v188
    %v190 = vpop.f32.mrf.mxu0
    %v191 = vpop.f32.mrf.mxu0
    %192 = vdwg.mxu0
    %v197 = vunpack.c.l.b16 %v71
    %v198 = vunpack.c.h.b16 %v71
    %v199 = vunpack.c.l.b16 %v72
    %v200 = vunpack.c.h.b16 %v72
    %v201 = vunpack.c.l.b16 %v73
    %v202 = vunpack.c.h.b16 %v73
    %v203 = vunpack.c.l.b16 %v74
    %v204 = vunpack.c.h.b16 %v74
    %v205 = vpack.c.b16 %v201, %v197
    %v206 = vpack.c.b16 %v202, %v198
    %v207 = vpack.c.b16 %v203, %v199
    %v208 = vpack.c.b16 %v204, %v200
    %vm213 = vcmask 130048
    %v215 = vsel %vm213, %v68, 0
    %217 = vmatprep.subr.bf16.mxu0 0
    %218 = vmatpush1.bf16.msra.mxu0 0
    %219 = vmatprep.subr.bf16.mxu0 0
    %220 = vmatpush1.bf16.msra.mxu0 0
    %221 = vmatprep.subr.bf16.mxu0 0
    %222 = vmatpush1.bf16.msra.mxu0 0
    %223 = vmatprep.subr.bf16.mxu0 0
    %224 = vmatpush1.bf16.msra.mxu0 0
    %225 = vmatprep.subr.bf16.mxu0 0
    %226 = vmatpush1.bf16.msra.mxu0 0
    %227 = vmatprep.subr.bf16.mxu0 0
    %228 = vmatpush1.bf16.msra.mxu0 0
    %229 = vmatprep.subr.bf16.mxu0 0
    %230 = vmatpush1.bf16.msra.mxu0 0
    %231 = vmatprep.subr.bf16.mxu0 %v206
    %232 = vmatpush1.bf16.msra.mxu0 %v205
    %233 = vmatprep.subr.bf16.mxu0 0
    %234 = vmatpush2.bf16.msra.mxu0 0
    %235 = vmatprep.subr.bf16.mxu0 0
    %236 = vmatpush2.bf16.msra.mxu0 0
    %237 = vmatprep.subr.bf16.mxu0 0
    %238 = vmatpush2.bf16.msra.mxu0 0
    %239 = vmatprep.subr.bf16.mxu0 0
    %240 = vmatpush2.bf16.msra.mxu0 0
    %241 = vmatprep.subr.bf16.mxu0 0
    %242 = vmatpush2.bf16.msra.mxu0 0
    %243 = vmatprep.subr.bf16.mxu0 0
    %244 = vmatpush2.bf16.msra.mxu0 0
    %245 = vmatprep.subr.bf16.mxu0 0
    %246 = vmatpush2.bf16.msra.mxu0 0
    %247 = vmatprep.subr.bf16.mxu0 0
    %248 = vmatpush2.bf16.msra.mxu0 0
    %249 = vmatprep.mubr.bf16.mxu0 0
    %250 = vmatmul.mubr.bf16.gmra.mxu0 %v215
    %v251 = vpop.f32.mrf.mxu0
    %v252 = vadd.f32 %v146, %v251
    %v253 = vpop.f32.mrf.mxu0
    %v254 = vadd.f32 %v148, %v253
    %v255 = vpop.f32.mrf.mxu0
    %v256 = vpop.f32.mrf.mxu0
    %257 = vdwg.mxu0
    %258 = vmatprep.subr.bf16.mxu0 0
    %259 = vmatpush1.bf16.msra.mxu0 0
    %260 = vmatprep.subr.bf16.mxu0 0
    %261 = vmatpush1.bf16.msra.mxu0 0
    %262 = vmatprep.subr.bf16.mxu0 0
    %263 = vmatpush1.bf16.msra.mxu0 0
    %264 = vmatprep.subr.bf16.mxu0 0
    %265 = vmatpush1.bf16.msra.mxu0 0
    %266 = vmatprep.subr.bf16.mxu0 0
    %267 = vmatpush1.bf16.msra.mxu0 0
    %268 = vmatprep.subr.bf16.mxu0 0
    %269 = vmatpush1.bf16.msra.mxu0 0
    %270 = vmatprep.subr.bf16.mxu0 0
    %271 = vmatpush1.bf16.msra.mxu0 0
    %272 = vmatprep.subr.bf16.mxu0 %v208
    %273 = vmatpush1.bf16.msra.mxu0 %v207
    %274 = vmatprep.subr.bf16.mxu0 0
    %275 = vmatpush2.bf16.msra.mxu0 0
    %276 = vmatprep.subr.bf16.mxu0 0
    %277 = vmatpush2.bf16.msra.mxu0 0
    %278 = vmatprep.subr.bf16.mxu0 0
    %279 = vmatpush2.bf16.msra.mxu0 0
    %280 = vmatprep.subr.bf16.mxu0 0
    %281 = vmatpush2.bf16.msra.mxu0 0
    %282 = vmatprep.subr.bf16.mxu0 0
    %283 = vmatpush2.bf16.msra.mxu0 0
    %284 = vmatprep.subr.bf16.mxu0 0
    %285 = vmatpush2.bf16.msra.mxu0 0
    %286 = vmatprep.subr.bf16.mxu0 0
    %287 = vmatpush2.bf16.msra.mxu0 0
    %288 = vmatprep.subr.bf16.mxu0 0
    %289 = vmatpush2.bf16.msra.mxu0 0
    %290 = vmatprep.mubr.bf16.mxu0 0
    %291 = vmatmul.mubr.bf16.gmra.mxu0 %v215
    %v292 = vpop.f32.mrf.mxu0
    %v293 = vadd.f32 %v187, %v292
    %v294 = vpop.f32.mrf.mxu0
    %v295 = vadd.f32 %v189, %v294
    %v296 = vpop.f32.mrf.mxu0
    %v297 = vpop.f32.mrf.mxu0
    %298 = vdwg.mxu0
    %v299 = vld [vmem:[%s4] sm:$0xf]
    %v301 = vlaneseq
    %v302 = vshrl.u32 %v301, 7
    %v303 = vsub.s32 0, %v302
    %v304 = vrot.slane %v299, %v303
    %v305 = vlaneseq
    %v306 = vshrl.u32 %v305, 7
    %v307 = vsub.s32 1, %v306
    %v308 = vrot.slane %v299, %v307
    %v309 = vlaneseq
    %v310 = vshrl.u32 %v309, 7
    %v311 = vsub.s32 2, %v310
    %v312 = vrot.slane %v299, %v311
    %v313 = vlaneseq
    %v314 = vshrl.u32 %v313, 7
    %v315 = vsub.s32 3, %v314
    %v316 = vrot.slane %v299, %v315
    %v321 = vadd.f32 %v252, %v304
    %v322 = vadd.f32 %v254, %v308
    %v323 = vadd.f32 %v293, %v312
    %v324 = vadd.f32 %v295, %v316
    %v325 = vmax.f32 %v321, 0.0
    %v326 = vmax.f32 %v322, 0.0
    %v327 = vmax.f32 %v323, 0.0
    %v328 = vmax.f32 %v324, 0.0
    %v329 = vpack.c.bf16 %v325, %v325
    %v330 = vpack.c.bf16 %v326, %v326
    %v331 = vpack.c.bf16 %v327, %v327
    %v332 = vpack.c.bf16 %v328, %v328
    %v333 = vld [vmem:[%s5] sm:$0xff]
    %v334 = vld [vmem:[%s5 + $0x8] sm:$0xff]
    %v335 = vld [vmem:[%s5 + $0x10] sm:$0xff]
    %v336 = vld [vmem:[%s5 + $0x18] sm:$0xff]
    %v337 = vld [vmem:[%s5 + $0x20] sm:$0xff]
    %v338 = vld [vmem:[%s5 + $0x28] sm:$0xff]
    %v339 = vld [vmem:[%s5 + $0x30] sm:$0xff]
    %v340 = vld [vmem:[%s5 + $0x38] sm:$0xff]
    %v341 = vld [vmem:[%s5 + $0x40] sm:$0xff]
    %v342 = vld [vmem:[%s5 + $0x48] sm:$0xff]
    %v343 = vld [vmem:[%s5 + $0x50] sm:$0xff]
    %v344 = vld [vmem:[%s5 + $0x58] sm:$0xff]
    %v345 = vld [vmem:[%s5 + $0x60] sm:$0xff]
    %v346 = vld [vmem:[%s5 + $0x68] sm:$0xff]
    %v347 = vld [vmem:[%s5 + $0x70] sm:$0xff]
    %v348 = vld [vmem:[%s5 + $0x78] sm:$0xff]
    %v349 = vld [vmem:[%s5 + $0x80] sm:$0xff]
    %v350 = vld [vmem:[%s5 + $0x88] sm:$0xff]
    %v351 = vld [vmem:[%s5 + $0x90] sm:$0xff]
    %v352 = vld [vmem:[%s5 + $0x98] sm:$0xff]
    %v353 = vld [vmem:[%s5 + $0xa0] sm:$0xff]
    %v354 = vld [vmem:[%s5 + $0xa8] sm:$0xff]
    %v355 = vld [vmem:[%s5 + $0xb0] sm:$0xff]
    %v356 = vld [vmem:[%s5 + $0xb8] sm:$0xff]
    %v357 = vld [vmem:[%s5 + $0xc0] sm:$0xff]
    %v358 = vld [vmem:[%s5 + $0xc8] sm:$0xff]
    %v359 = vld [vmem:[%s5 + $0xd0] sm:$0xff]
    %v360 = vld [vmem:[%s5 + $0xd8] sm:$0xff]
    %v361 = vld [vmem:[%s5 + $0xe0] sm:$0xff]
    %v362 = vld [vmem:[%s5 + $0xe8] sm:$0xff]
    %v363 = vld [vmem:[%s5 + $0xf0] sm:$0xff]
    %v364 = vld [vmem:[%s5 + $0xf8] sm:$0xff]
    %v365 = vld [vmem:[%s6] sm:$0x3]
    %v367 = vlaneseq
    %v368 = vshrl.u32 %v367, 7
    %v369 = vsub.s32 0, %v368
    %v370 = vrot.slane %v365, %v369
    %v371 = vlaneseq
    %v372 = vshrl.u32 %v371, 7
    %v373 = vsub.s32 1, %v372
    %v374 = vrot.slane %v365, %v373
    %v409 = vunpack.c.l.b16 %v333
    %v410 = vunpack.c.h.b16 %v333
    %v411 = vunpack.c.l.b16 %v334
    %v412 = vunpack.c.h.b16 %v334
    %v413 = vunpack.c.l.b16 %v335
    %v414 = vunpack.c.h.b16 %v335
    %v415 = vunpack.c.l.b16 %v336
    %v416 = vunpack.c.h.b16 %v336
    %v417 = vunpack.c.l.b16 %v337
    %v418 = vunpack.c.h.b16 %v337
    %v419 = vunpack.c.l.b16 %v338
    %v420 = vunpack.c.h.b16 %v338
    %v421 = vunpack.c.l.b16 %v339
    %v422 = vunpack.c.h.b16 %v339
    %v423 = vunpack.c.l.b16 %v340
    %v424 = vunpack.c.h.b16 %v340
    %v425 = vunpack.c.l.b16 %v341
    %v426 = vunpack.c.h.b16 %v341
    %v427 = vunpack.c.l.b16 %v342
    %v428 = vunpack.c.h.b16 %v342
    %v429 = vunpack.c.l.b16 %v343
    %v430 = vunpack.c.h.b16 %v343
    %v431 = vunpack.c.l.b16 %v344
    %v432 = vunpack.c.h.b16 %v344
    %v433 = vunpack.c.l.b16 %v345
    %v434 = vunpack.c.h.b16 %v345
    %v435 = vunpack.c.l.b16 %v346
    %v436 = vunpack.c.h.b16 %v346
    %v437 = vunpack.c.l.b16 %v347
    %v438 = vunpack.c.h.b16 %v347
    %v439 = vunpack.c.l.b16 %v348
    %v440 = vunpack.c.h.b16 %v348
    %v441 = vunpack.c.l.b16 %v349
    %v442 = vunpack.c.h.b16 %v349
    %v443 = vunpack.c.l.b16 %v350
    %v444 = vunpack.c.h.b16 %v350
    %v445 = vunpack.c.l.b16 %v351
    %v446 = vunpack.c.h.b16 %v351
    %v447 = vunpack.c.l.b16 %v352
    %v448 = vunpack.c.h.b16 %v352
    %v449 = vunpack.c.l.b16 %v353
    %v450 = vunpack.c.h.b16 %v353
    %v451 = vunpack.c.l.b16 %v354
    %v452 = vunpack.c.h.b16 %v354
    %v453 = vunpack.c.l.b16 %v355
    %v454 = vunpack.c.h.b16 %v355
    %v455 = vunpack.c.l.b16 %v356
    %v456 = vunpack.c.h.b16 %v356
    %v457 = vunpack.c.l.b16 %v357
    %v458 = vunpack.c.h.b16 %v357
    %v459 = vunpack.c.l.b16 %v358
    %v460 = vunpack.c.h.b16 %v358
    %v461 = vunpack.c.l.b16 %v359
    %v462 = vunpack.c.h.b16 %v359
    %v463 = vunpack.c.l.b16 %v360
    %v464 = vunpack.c.h.b16 %v360
    %v465 = vunpack.c.l.b16 %v361
    %v466 = vunpack.c.h.b16 %v361
    %v467 = vunpack.c.l.b16 %v362
    %v468 = vunpack.c.h.b16 %v362
    %v469 = vunpack.c.l.b16 %v363
    %v470 = vunpack.c.h.b16 %v363
    %v471 = vunpack.c.l.b16 %v364
    %v472 = vunpack.c.h.b16 %v364
    %v473 = vpack.c.b16 %v411, %v409
    %v474 = vpack.c.b16 %v412, %v410
    %v475 = vpack.c.b16 %v415, %v413
    %v476 = vpack.c.b16 %v416, %v414
    %v477 = vpack.c.b16 %v419, %v417
    %v478 = vpack.c.b16 %v420, %v418
    %v479 = vpack.c.b16 %v423, %v421
    %v480 = vpack.c.b16 %v424, %v422
    %v481 = vpack.c.b16 %v427, %v425
    %v482 = vpack.c.b16 %v428, %v426
    %v483 = vpack.c.b16 %v431, %v429
    %v484 = vpack.c.b16 %v432, %v430
    %v485 = vpack.c.b16 %v435, %v433
    %v486 = vpack.c.b16 %v436, %v434
    %v487 = vpack.c.b16 %v439, %v437
    %v488 = vpack.c.b16 %v440, %v438
    %v489 = vpack.c.b16 %v443, %v441
    %v490 = vpack.c.b16 %v444, %v442
    %v491 = vpack.c.b16 %v447, %v445
    %v492 = vpack.c.b16 %v448, %v446
    %v493 = vpack.c.b16 %v451, %v449
    %v494 = vpack.c.b16 %v452, %v450
    %v495 = vpack.c.b16 %v455, %v453
    %v496 = vpack.c.b16 %v456, %v454
    %v497 = vpack.c.b16 %v459, %v457
    %v498 = vpack.c.b16 %v460, %v458
    %v499 = vpack.c.b16 %v463, %v461
    %v500 = vpack.c.b16 %v464, %v462
    %v501 = vpack.c.b16 %v467, %v465
    %v502 = vpack.c.b16 %v468, %v466
    %v503 = vpack.c.b16 %v471, %v469
    %v504 = vpack.c.b16 %v472, %v470
    %537 = vmatprep.subr.bf16.mxu0 %v488
    %538 = vmatpush1.bf16.msra.mxu0 %v487
    %539 = vmatprep.subr.bf16.mxu0 %v486
    %540 = vmatpush1.bf16.msra.mxu0 %v485
    %541 = vmatprep.subr.bf16.mxu0 %v484
    %542 = vmatpush1.bf16.msra.mxu0 %v483
    %543 = vmatprep.subr.bf16.mxu0 %v482
    %544 = vmatpush1.bf16.msra.mxu0 %v481
    %545 = vmatprep.subr.bf16.mxu0 %v480
    %546 = vmatpush1.bf16.msra.mxu0 %v479
    %547 = vmatprep.subr.bf16.mxu0 %v478
    %548 = vmatpush1.bf16.msra.mxu0 %v477
    %549 = vmatprep.subr.bf16.mxu0 %v476
    %550 = vmatpush1.bf16.msra.mxu0 %v475
    %551 = vmatprep.subr.bf16.mxu0 %v474
    %552 = vmatpush1.bf16.msra.mxu0 %v473
    %553 = vmatprep.subr.bf16.mxu0 %v504
    %554 = vmatpush2.bf16.msra.mxu0 %v503
    %555 = vmatprep.subr.bf16.mxu0 %v502
    %556 = vmatpush2.bf16.msra.mxu0 %v501
    %557 = vmatprep.subr.bf16.mxu0 %v500
    %558 = vmatpush2.bf16.msra.mxu0 %v499
    %559 = vmatprep.subr.bf16.mxu0 %v498
    %560 = vmatpush2.bf16.msra.mxu0 %v497
    %561 = vmatprep.subr.bf16.mxu0 %v496
    %562 = vmatpush2.bf16.msra.mxu0 %v495
    %563 = vmatprep.subr.bf16.mxu0 %v494
    %564 = vmatpush2.bf16.msra.mxu0 %v493
    %565 = vmatprep.subr.bf16.mxu0 %v492
    %566 = vmatpush2.bf16.msra.mxu0 %v491
    %567 = vmatprep.subr.bf16.mxu0 %v490
    %568 = vmatpush2.bf16.msra.mxu0 %v489
    %569 = vmatprep.mubr.bf16.mxu0 %v330
    %570 = vmatmul.mubr.bf16.gmra.mxu0 %v329
    %v571 = vpop.f32.mrf.mxu0
    %v572 = vadd.f32 %v370, %v571
    %v573 = vpop.f32.mrf.mxu0
    %v574 = vadd.f32 %v374, %v573
    %v575 = vpop.f32.mrf.mxu0
    %v576 = vpop.f32.mrf.mxu0
    %577 = vdwg.mxu0
    %v578 = vmax.f32 %v572, 0.0
    %v579 = vmax.f32 %v574, 0.0
    %v580 = vld [vmem:[#allocation4] sm:$0xff]
    %v581 = vld [vmem:[#allocation4 + $0x8] sm:$0xff]
    %v582 = vld [vmem:[#allocation4 + $0x10] sm:$0xff]
    %v583 = vld [vmem:[#allocation4 + $0x18] sm:$0xff]
    %v584 = vld [vmem:[#allocation4 + $0x20] sm:$0xff]
    %v585 = vld [vmem:[#allocation4 + $0x28] sm:$0xff]
    %v586 = vld [vmem:[#allocation4 + $0x30] sm:$0xff]
    %v587 = vld [vmem:[#allocation4 + $0x38] sm:$0xff]
    %v588 = vld [vmem:[#allocation4 + $0x40] sm:$0xff]
    %v589 = vld [vmem:[#allocation4 + $0x48] sm:$0xff]
    %v590 = vld [vmem:[#allocation4 + $0x50] sm:$0xff]
    %v591 = vld [vmem:[#allocation4 + $0x58] sm:$0xff]
    %v592 = vld [vmem:[#allocation4 + $0x60] sm:$0xff]
    %v593 = vld [vmem:[#allocation4 + $0x68] sm:$0xff]
    %v594 = vld [vmem:[#allocation4 + $0x70] sm:$0xff]
    %v595 = vld [vmem:[#allocation4 + $0x78] sm:$0xff]
    %v596 = vld [vmem:[#allocation4 + $0x80] sm:$0xff]
    %v597 = vld [vmem:[#allocation4 + $0x88] sm:$0xff]
    %v598 = vld [vmem:[#allocation4 + $0x90] sm:$0xff]
    %v599 = vld [vmem:[#allocation4 + $0x98] sm:$0xff]
    %v600 = vld [vmem:[#allocation4 + $0xa0] sm:$0xff]
    %v601 = vld [vmem:[#allocation4 + $0xa8] sm:$0xff]
    %v602 = vld [vmem:[#allocation4 + $0xb0] sm:$0xff]
    %v603 = vld [vmem:[#allocation4 + $0xb8] sm:$0xff]
    %v604 = vld [vmem:[#allocation4 + $0xc0] sm:$0xff]
    %v605 = vld [vmem:[#allocation4 + $0xc8] sm:$0xff]
    %v606 = vld [vmem:[#allocation4 + $0xd0] sm:$0xff]
    %v607 = vld [vmem:[#allocation4 + $0xd8] sm:$0xff]
    %v608 = vld [vmem:[#allocation4 + $0xe0] sm:$0xff]
    %v609 = vld [vmem:[#allocation4 + $0xe8] sm:$0xff]
    %v610 = vld [vmem:[#allocation4 + $0xf0] sm:$0xff]
    %v611 = vld [vmem:[#allocation4 + $0xf8] sm:$0xff]
    %v612 = vld [vmem:[%s8] sm:$0x3]
    %v614 = vlaneseq
    %v615 = vshrl.u32 %v614, 7
    %v616 = vsub.s32 0, %v615
    %v617 = vrot.slane %v612, %v616
    %v618 = vlaneseq
    %v619 = vshrl.u32 %v618, 7
    %v620 = vsub.s32 1, %v619
    %v621 = vrot.slane %v612, %v620
    %v656 = vunpack.c.l.b16 %v580
    %v657 = vunpack.c.h.b16 %v580
    %v658 = vunpack.c.l.b16 %v581
    %v659 = vunpack.c.h.b16 %v581
    %v660 = vunpack.c.l.b16 %v582
    %v661 = vunpack.c.h.b16 %v582
    %v662 = vunpack.c.l.b16 %v583
    %v663 = vunpack.c.h.b16 %v583
    %v664 = vunpack.c.l.b16 %v584
    %v665 = vunpack.c.h.b16 %v584
    %v666 = vunpack.c.l.b16 %v585
    %v667 = vunpack.c.h.b16 %v585
    %v668 = vunpack.c.l.b16 %v586
    %v669 = vunpack.c.h.b16 %v586
    %v670 = vunpack.c.l.b16 %v587
    %v671 = vunpack.c.h.b16 %v587
    %v672 = vunpack.c.l.b16 %v588
    %v673 = vunpack.c.h.b16 %v588
    %v674 = vunpack.c.l.b16 %v589
    %v675 = vunpack.c.h.b16 %v589
    %v676 = vunpack.c.l.b16 %v590
    %v677 = vunpack.c.h.b16 %v590
    %v678 = vunpack.c.l.b16 %v591
    %v679 = vunpack.c.h.b16 %v591
    %v680 = vunpack.c.l.b16 %v592
    %v681 = vunpack.c.h.b16 %v592
    %v682 = vunpack.c.l.b16 %v593
    %v683 = vunpack.c.h.b16 %v593
    %v684 = vunpack.c.l.b16 %v594
    %v685 = vunpack.c.h.b16 %v594
    %v686 = vunpack.c.l.b16 %v595
    %v687 = vunpack.c.h.b16 %v595
    %v688 = vunpack.c.l.b16 %v596
    %v689 = vunpack.c.h.b16 %v596
    %v690 = vunpack.c.l.b16 %v597
    %v691 = vunpack.c.h.b16 %v597
    %v692 = vunpack.c.l.b16 %v598
    %v693 = vunpack.c.h.b16 %v598
    %v694 = vunpack.c.l.b16 %v599
    %v695 = vunpack.c.h.b16 %v599
    %v696 = vunpack.c.l.b16 %v600
    %v697 = vunpack.c.h.b16 %v600
    %v698 = vunpack.c.l.b16 %v601
    %v699 = vunpack.c.h.b16 %v601
    %v700 = vunpack.c.l.b16 %v602
    %v701 = vunpack.c.h.b16 %v602
    %v702 = vunpack.c.l.b16 %v603
    %v703 = vunpack.c.h.b16 %v603
    %v704 = vunpack.c.l.b16 %v604
    %v705 = vunpack.c.h.b16 %v604
    %v706 = vunpack.c.l.b16 %v605
    %v707 = vunpack.c.h.b16 %v605
    %v708 = vunpack.c.l.b16 %v606
    %v709 = vunpack.c.h.b16 %v606
    %v710 = vunpack.c.l.b16 %v607
    %v711 = vunpack.c.h.b16 %v607
    %v712 = vunpack.c.l.b16 %v608
    %v713 = vunpack.c.h.b16 %v608
    %v714 = vunpack.c.l.b16 %v609
    %v715 = vunpack.c.h.b16 %v609
    %v716 = vunpack.c.l.b16 %v610
    %v717 = vunpack.c.h.b16 %v610
    %v718 = vunpack.c.l.b16 %v611
    %v719 = vunpack.c.h.b16 %v611
    %v720 = vpack.c.b16 %v658, %v656
    %v721 = vpack.c.b16 %v659, %v657
    %v722 = vpack.c.b16 %v662, %v660
    %v723 = vpack.c.b16 %v663, %v661
    %v724 = vpack.c.b16 %v666, %v664
    %v725 = vpack.c.b16 %v667, %v665
    %v726 = vpack.c.b16 %v670, %v668
    %v727 = vpack.c.b16 %v671, %v669
    %v728 = vpack.c.b16 %v674, %v672
    %v729 = vpack.c.b16 %v675, %v673
    %v730 = vpack.c.b16 %v678, %v676
    %v731 = vpack.c.b16 %v679, %v677
    %v732 = vpack.c.b16 %v682, %v680
    %v733 = vpack.c.b16 %v683, %v681
    %v734 = vpack.c.b16 %v686, %v684
    %v735 = vpack.c.b16 %v687, %v685
    %v736 = vpack.c.b16 %v690, %v688
    %v737 = vpack.c.b16 %v691, %v689
    %v738 = vpack.c.b16 %v694, %v692
    %v739 = vpack.c.b16 %v695, %v693
    %v740 = vpack.c.b16 %v698, %v696
    %v741 = vpack.c.b16 %v699, %v697
    %v742 = vpack.c.b16 %v702, %v700
    %v743 = vpack.c.b16 %v703, %v701
    %v744 = vpack.c.b16 %v706, %v704
    %v745 = vpack.c.b16 %v707, %v705
    %v746 = vpack.c.b16 %v710, %v708
    %v747 = vpack.c.b16 %v711, %v709
    %v748 = vpack.c.b16 %v714, %v712
    %v749 = vpack.c.b16 %v715, %v713
    %v750 = vpack.c.b16 %v718, %v716
    %v751 = vpack.c.b16 %v719, %v717
    %784 = vmatprep.subr.bf16.mxu0 %v735
    %785 = vmatpush1.bf16.msra.mxu0 %v734
    %786 = vmatprep.subr.bf16.mxu0 %v733
    %787 = vmatpush1.bf16.msra.mxu0 %v732
    %788 = vmatprep.subr.bf16.mxu0 %v731
    %789 = vmatpush1.bf16.msra.mxu0 %v730
    %790 = vmatprep.subr.bf16.mxu0 %v729
    %791 = vmatpush1.bf16.msra.mxu0 %v728
    %792 = vmatprep.subr.bf16.mxu0 %v727
    %793 = vmatpush1.bf16.msra.mxu0 %v726
    %794 = vmatprep.subr.bf16.mxu0 %v725
    %795 = vmatpush1.bf16.msra.mxu0 %v724
    %796 = vmatprep.subr.bf16.mxu0 %v723
    %797 = vmatpush1.bf16.msra.mxu0 %v722
    %798 = vmatprep.subr.bf16.mxu0 %v721
    %799 = vmatpush1.bf16.msra.mxu0 %v720
    %800 = vmatprep.subr.bf16.mxu0 %v751
    %801 = vmatpush2.bf16.msra.mxu0 %v750
    %802 = vmatprep.subr.bf16.mxu0 %v749
    %803 = vmatpush2.bf16.msra.mxu0 %v748
    %804 = vmatprep.subr.bf16.mxu0 %v747
    %805 = vmatpush2.bf16.msra.mxu0 %v746
    %806 = vmatprep.subr.bf16.mxu0 %v745
    %807 = vmatpush2.bf16.msra.mxu0 %v744
    %808 = vmatprep.subr.bf16.mxu0 %v743
    %809 = vmatpush2.bf16.msra.mxu0 %v742
    %810 = vmatprep.subr.bf16.mxu0 %v741
    %811 = vmatpush2.bf16.msra.mxu0 %v740
    %812 = vmatprep.subr.bf16.mxu0 %v739
    %813 = vmatpush2.bf16.msra.mxu0 %v738
    %814 = vmatprep.subr.bf16.mxu0 %v737
    %815 = vmatpush2.bf16.msra.mxu0 %v736
    %816 = vmatprep.mubr.bf16.mxu0 %v332
    %817 = vmatmul.mubr.bf16.gmra.mxu0 %v331
    %v818 = vpop.f32.mrf.mxu0
    %v819 = vadd.f32 %v617, %v818
    %v820 = vpop.f32.mrf.mxu0
    %v821 = vadd.f32 %v621, %v820
    %v822 = vpop.f32.mrf.mxu0
    %v823 = vpop.f32.mrf.mxu0
    %824 = vdwg.mxu0
    %v825 = vmax.f32 %v819, 0.0
    %v826 = vmax.f32 %v821, 0.0
    %v827 = vpack.c.bf16 %v578, %v578
    %v828 = vpack.c.bf16 %v579, %v579
    %v829 = vpack.c.bf16 %v825, %v825
    %v830 = vpack.c.bf16 %v826, %v826
    %v831 = vld [vmem:[%s9] sm:$0xf]
    %v832 = vld [vmem:[%s9 + $0x4] sm:$0xf]
    %v833 = vld [vmem:[%s9 + $0x8] sm:$0xf]
    %v834 = vld [vmem:[%s9 + $0xc] sm:$0xf]
    %v835 = vld [vmem:[%s9 + $0x10] sm:$0xf]
    %v836 = vld [vmem:[%s9 + $0x14] sm:$0xf]
    %v837 = vld [vmem:[%s9 + $0x18] sm:$0xf]
    %v838 = vld [vmem:[%s9 + $0x1c] sm:$0xf]
    %v839 = vld [vmem:[%s9 + $0x20] sm:$0xf]
    %v840 = vld [vmem:[%s9 + $0x24] sm:$0xf]
    %v841 = vld [vmem:[%s9 + $0x28] sm:$0xf]
    %v842 = vld [vmem:[%s9 + $0x2c] sm:$0xf]
    %v843 = vld [vmem:[%s9 + $0x30] sm:$0xf]
    %v844 = vld [vmem:[%s9 + $0x34] sm:$0xf]
    %v845 = vld [vmem:[%s9 + $0x38] sm:$0xf]
    %v846 = vld [vmem:[%s9 + $0x3c] sm:$0xf]
    %v847 = vld [vmem:[%s9 + $0x40] sm:$0xf]
    %v848 = vld [vmem:[%s9 + $0x44] sm:$0xf]
    %v849 = vld [vmem:[%s9 + $0x48] sm:$0xf]
    %v850 = vld [vmem:[%s9 + $0x4c] sm:$0xf]
    %v851 = vld [vmem:[%s9 + $0x50] sm:$0xf]
    %v852 = vld [vmem:[%s9 + $0x54] sm:$0xf]
    %v853 = vld [vmem:[%s9 + $0x58] sm:$0xf]
    %v854 = vld [vmem:[%s9 + $0x5c] sm:$0xf]
    %v855 = vld [vmem:[%s9 + $0x60] sm:$0xf]
    %v856 = vld [vmem:[%s9 + $0x64] sm:$0xf]
    %v857 = vld [vmem:[%s9 + $0x68] sm:$0xf]
    %v858 = vld [vmem:[%s9 + $0x6c] sm:$0xf]
    %v859 = vld [vmem:[%s9 + $0x70] sm:$0xf]
    %v860 = vld [vmem:[%s9 + $0x74] sm:$0xf]
    %v861 = vld [vmem:[%s9 + $0x78] sm:$0xf]
    %v862 = vld [vmem:[%s9 + $0x7c] sm:$0xf]
    %v863 = vld [vmem:[%s9 + $0x80] sm:$0xf]
    %v864 = vld [vmem:[%s9 + $0x84] sm:$0xf]
    %v865 = vld [vmem:[%s9 + $0x88] sm:$0xf]
    %v866 = vld [vmem:[%s9 + $0x8c] sm:$0xf]
    %v867 = vld [vmem:[%s9 + $0x90] sm:$0xf]
    %v868 = vld [vmem:[%s9 + $0x94] sm:$0xf]
    %v869 = vld [vmem:[%s9 + $0x98] sm:$0xf]
    %v870 = vld [vmem:[%s9 + $0x9c] sm:$0xf]
    %v871 = vld [vmem:[%s9 + $0xa0] sm:$0xf]
    %v872 = vld [vmem:[%s9 + $0xa4] sm:$0xf]
    %v873 = vld [vmem:[%s9 + $0xa8] sm:$0xf]
    %v874 = vld [vmem:[%s9 + $0xac] sm:$0xf]
    %v875 = vld [vmem:[%s9 + $0xb0] sm:$0xf]
    %v876 = vld [vmem:[%s9 + $0xb4] sm:$0xf]
    %v877 = vld [vmem:[%s9 + $0xb8] sm:$0xf]
    %v878 = vld [vmem:[%s9 + $0xbc] sm:$0xf]
    %v879 = vld [vmem:[%s9 + $0xc0] sm:$0xf]
    %v880 = vld [vmem:[%s9 + $0xc4] sm:$0xf]
    %v881 = vld [vmem:[%s9 + $0xc8] sm:$0xf]
    %v882 = vld [vmem:[%s9 + $0xcc] sm:$0xf]
    %v883 = vld [vmem:[%s9 + $0xd0] sm:$0xf]
    %v884 = vld [vmem:[%s9 + $0xd4] sm:$0xf]
    %v885 = vld [vmem:[%s9 + $0xd8] sm:$0xf]
    %v886 = vld [vmem:[%s9 + $0xdc] sm:$0xf]
    %v887 = vld [vmem:[%s9 + $0xe0] sm:$0xf]
    %v888 = vld [vmem:[%s9 + $0xe4] sm:$0xf]
    %v889 = vld [vmem:[%s9 + $0xe8] sm:$0xf]
    %v890 = vld [vmem:[%s9 + $0xec] sm:$0xf]
    %v891 = vld [vmem:[%s9 + $0xf0] sm:$0xf]
    %v892 = vld [vmem:[%s9 + $0xf4] sm:$0xf]
    %v893 = vld [vmem:[%s9 + $0xf8] sm:$0xf]
    %v894 = vld [vmem:[%s9 + $0xfc] sm:$0xf]
    %v895 = vld [vmem:[%s10] sm:$0x1]
    %v897 = vlaneseq
    %v898 = vshrl.u32 %v897, 7
    %v899 = vsub.s32 0, %v898
    %v900 = vrot.slane %v895, %v899
    %v966 = vunpack.c.l.b16 %v831
    %v967 = vunpack.c.l.b16 %v832
    %v968 = vunpack.c.l.b16 %v833
    %v969 = vunpack.c.l.b16 %v834
    %v970 = vunpack.c.l.b16 %v835
    %v971 = vunpack.c.l.b16 %v836
    %v972 = vunpack.c.l.b16 %v837
    %v973 = vunpack.c.l.b16 %v838
    %v974 = vunpack.c.l.b16 %v839
    %v975 = vunpack.c.l.b16 %v840
    %v976 = vunpack.c.l.b16 %v841
    %v977 = vunpack.c.l.b16 %v842
    %v978 = vunpack.c.l.b16 %v843
    %v979 = vunpack.c.l.b16 %v844
    %v980 = vunpack.c.l.b16 %v845
    %v981 = vunpack.c.l.b16 %v846
    %v982 = vunpack.c.l.b16 %v847
    %v983 = vunpack.c.l.b16 %v848
    %v984 = vunpack.c.l.b16 %v849
    %v985 = vunpack.c.l.b16 %v850
    %v986 = vunpack.c.l.b16 %v851
    %v987 = vunpack.c.l.b16 %v852
    %v988 = vunpack.c.l.b16 %v853
    %v989 = vunpack.c.l.b16 %v854
    %v990 = vunpack.c.l.b16 %v855
    %v991 = vunpack.c.l.b16 %v856
    %v992 = vunpack.c.l.b16 %v857
    %v993 = vunpack.c.l.b16 %v858
    %v994 = vunpack.c.l.b16 %v859
    %v995 = vunpack.c.l.b16 %v860
    %v996 = vunpack.c.l.b16 %v861
    %v997 = vunpack.c.l.b16 %v862
    %v998 = vunpack.c.l.b16 %v863
    %v999 = vunpack.c.l.b16 %v864
    %v1000 = vunpack.c.l.b16 %v865
    %v1001 = vunpack.c.l.b16 %v866
    %v1002 = vunpack.c.l.b16 %v867
    %v1003 = vunpack.c.l.b16 %v868
    %v1004 = vunpack.c.l.b16 %v869
    %v1005 = vunpack.c.l.b16 %v870
    %v1006 = vunpack.c.l.b16 %v871
    %v1007 = vunpack.c.l.b16 %v872
    %v1008 = vunpack.c.l.b16 %v873
    %v1009 = vunpack.c.l.b16 %v874
    %v1010 = vunpack.c.l.b16 %v875
    %v1011 = vunpack.c.l.b16 %v876
    %v1012 = vunpack.c.l.b16 %v877
    %v1013 = vunpack.c.l.b16 %v878
    %v1014 = vunpack.c.l.b16 %v879
    %v1015 = vunpack.c.l.b16 %v880
    %v1016 = vunpack.c.l.b16 %v881
    %v1017 = vunpack.c.l.b16 %v882
    %v1018 = vunpack.c.l.b16 %v883
    %v1019 = vunpack.c.l.b16 %v884
    %v1020 = vunpack.c.l.b16 %v885
    %v1021 = vunpack.c.l.b16 %v886
    %v1022 = vunpack.c.l.b16 %v887
    %v1023 = vunpack.c.l.b16 %v888
    %v1024 = vunpack.c.l.b16 %v889
    %v1025 = vunpack.c.l.b16 %v890
    %v1026 = vunpack.c.l.b16 %v891
    %v1027 = vunpack.c.l.b16 %v892
    %v1028 = vunpack.c.l.b16 %v893
    %v1029 = vunpack.c.l.b16 %v894
    %v1030 = vpack.c.b16 %v967, %v966
    %v1031 = vpack.c.b16 %v969, %v968
    %v1032 = vpack.c.b16 %v971, %v970
    %v1033 = vpack.c.b16 %v973, %v972
    %v1034 = vpack.c.b16 %v975, %v974
    %v1035 = vpack.c.b16 %v977, %v976
    %v1036 = vpack.c.b16 %v979, %v978
    %v1037 = vpack.c.b16 %v981, %v980
    %v1038 = vpack.c.b16 %v983, %v982
    %v1039 = vpack.c.b16 %v985, %v984
    %v1040 = vpack.c.b16 %v987, %v986
    %v1041 = vpack.c.b16 %v989, %v988
    %v1042 = vpack.c.b16 %v991, %v990
    %v1043 = vpack.c.b16 %v993, %v992
    %v1044 = vpack.c.b16 %v995, %v994
    %v1045 = vpack.c.b16 %v997, %v996
    %v1046 = vpack.c.b16 %v999, %v998
    %v1047 = vpack.c.b16 %v1001, %v1000
    %v1048 = vpack.c.b16 %v1003, %v1002
    %v1049 = vpack.c.b16 %v1005, %v1004
    %v1050 = vpack.c.b16 %v1007, %v1006
    %v1051 = vpack.c.b16 %v1009, %v1008
    %v1052 = vpack.c.b16 %v1011, %v1010
    %v1053 = vpack.c.b16 %v1013, %v1012
    %v1054 = vpack.c.b16 %v1015, %v1014
    %v1055 = vpack.c.b16 %v1017, %v1016
    %v1056 = vpack.c.b16 %v1019, %v1018
    %v1057 = vpack.c.b16 %v1021, %v1020
    %v1058 = vpack.c.b16 %v1023, %v1022
    %v1059 = vpack.c.b16 %v1025, %v1024
    %v1060 = vpack.c.b16 %v1027, %v1026
    %v1061 = vpack.c.b16 %v1029, %v1028
    %1094 = vmatprep.subr.bf16.mxu0 0
    %1095 = vmatpush1.bf16.msra.mxu0 %v1037
    %1096 = vmatprep.subr.bf16.mxu0 0
    %1097 = vmatpush1.bf16.msra.mxu0 %v1036
    %1098 = vmatprep.subr.bf16.mxu0 0
    %1099 = vmatpush1.bf16.msra.mxu0 %v1035
    %1100 = vmatprep.subr.bf16.mxu0 0
    %1101 = vmatpush1.bf16.msra.mxu0 %v1034
    %1102 = vmatprep.subr.bf16.mxu0 0
    %1103 = vmatpush1.bf16.msra.mxu0 %v1033
    %1104 = vmatprep.subr.bf16.mxu0 0
    %1105 = vmatpush1.bf16.msra.mxu0 %v1032
    %1106 = vmatprep.subr.bf16.mxu0 0
    %1107 = vmatpush1.bf16.msra.mxu0 %v1031
    %1108 = vmatprep.subr.bf16.mxu0 0
    %1109 = vmatpush1.bf16.msra.mxu0 %v1030
    %1110 = vmatprep.subr.bf16.mxu0 0
    %1111 = vmatpush2.bf16.msra.mxu0 %v1045
    %1112 = vmatprep.subr.bf16.mxu0 0
    %1113 = vmatpush2.bf16.msra.mxu0 %v1044
    %1114 = vmatprep.subr.bf16.mxu0 0
    %1115 = vmatpush2.bf16.msra.mxu0 %v1043
    %1116 = vmatprep.subr.bf16.mxu0 0
    %1117 = vmatpush2.bf16.msra.mxu0 %v1042
    %1118 = vmatprep.subr.bf16.mxu0 0
    %1119 = vmatpush2.bf16.msra.mxu0 %v1041
    %1120 = vmatprep.subr.bf16.mxu0 0
    %1121 = vmatpush2.bf16.msra.mxu0 %v1040
    %1122 = vmatprep.subr.bf16.mxu0 0
    %1123 = vmatpush2.bf16.msra.mxu0 %v1039
    %1124 = vmatprep.subr.bf16.mxu0 0
    %1125 = vmatpush2.bf16.msra.mxu0 %v1038
    %1126 = vmatprep.mubr.bf16.mxu0 %v828
    %1127 = vmatmul.mubr.bf16.gmra.mxu0 %v827
    %v1128 = vpop.f32.mrf.mxu0
    %v1129 = vadd.f32 %v900, %v1128
    %v1130 = vpop.f32.mrf.mxu0
    %v1131 = vpop.f32.mrf.mxu0
    %v1132 = vpop.f32.mrf.mxu0
    %1133 = vdwg.mxu0
    %1134 = vmatprep.subr.bf16.mxu0 0
    %1135 = vmatpush1.bf16.msra.mxu0 %v1053
    %1136 = vmatprep.subr.bf16.mxu0 0
    %1137 = vmatpush1.bf16.msra.mxu0 %v1052
    %1138 = vmatprep.subr.bf16.mxu0 0
    %1139 = vmatpush1.bf16.msra.mxu0 %v1051
    %1140 = vmatprep.subr.bf16.mxu0 0
    %1141 = vmatpush1.bf16.msra.mxu0 %v1050
    %1142 = vmatprep.subr.bf16.mxu0 0
    %1143 = vmatpush1.bf16.msra.mxu0 %v1049
    %1144 = vmatprep.subr.bf16.mxu0 0
    %1145 = vmatpush1.bf16.msra.mxu0 %v1048
    %1146 = vmatprep.subr.bf16.mxu0 0
    %1147 = vmatpush1.bf16.msra.mxu0 %v1047
    %1148 = vmatprep.subr.bf16.mxu0 0
    %1149 = vmatpush1.bf16.msra.mxu0 %v1046
    %1150 = vmatprep.subr.bf16.mxu0 0
    %1151 = vmatpush2.bf16.msra.mxu0 %v1061
    %1152 = vmatprep.subr.bf16.mxu0 0
    %1153 = vmatpush2.bf16.msra.mxu0 %v1060
    %1154 = vmatprep.subr.bf16.mxu0 0
    %1155 = vmatpush2.bf16.msra.mxu0 %v1059
    %1156 = vmatprep.subr.bf16.mxu0 0
    %1157 = vmatpush2.bf16.msra.mxu0 %v1058
    %1158 = vmatprep.subr.bf16.mxu0 0
    %1159 = vmatpush2.bf16.msra.mxu0 %v1057
    %1160 = vmatprep.subr.bf16.mxu0 0
    %1161 = vmatpush2.bf16.msra.mxu0 %v1056
    %1162 = vmatprep.subr.bf16.mxu0 0
    %1163 = vmatpush2.bf16.msra.mxu0 %v1055
    %1164 = vmatprep.subr.bf16.mxu0 0
    %1165 = vmatpush2.bf16.msra.mxu0 %v1054
    %1166 = vmatprep.mubr.bf16.mxu0 %v830
    %1167 = vmatmul.mubr.bf16.gmra.mxu0 %v829
    %v1168 = vpop.f32.mrf.mxu0
    %v1169 = vadd.f32 %v1129, %v1168
    %v1170 = vpop.f32.mrf.mxu0
    %v1171 = vpop.f32.mrf.mxu0
    %v1172 = vpop.f32.mrf.mxu0
    %1173 = vdwg.mxu0
    %vm1174 = vcmask 15360
    %1175 = vst.msk [vmem:[%s11] sm:$0xff] %vm1174, %v1169
    // Predicated region
    $region54: #{critic_forward.1} parent=1 // pred_check
      _
    $region55: #{critic_forward.1} parent=1 // pred_check_branch
      %1177 = sbr.rel (0) target = $region57
    $region56: #{critic_forward.1} parent=1 // pred_region
      _
    $region57: #{critic_forward.1} parent=1 // pred_fallthru
      _
    // Predicated region
    $region58: #{critic_forward.1} parent=1 // pred_check
      _
    $region59: #{critic_forward.1} parent=1 // pred_check_branch
      %1179 = sbr.rel (0) target = $region61
    $region60: #{critic_forward.1} parent=1 // pred_region
      _
    $region61: #{critic_forward.1} parent=1 // pred_fallthru
      _
    %1180 = vsyncpa [#allocation3], 1
    %1181 = vsyncpa [#allocation5], 1

</llo_original>
